<compile_context>
chip_gen: v7x
topology: tpu7x:2x2x1
jax: 0.10.0
libtpu: 0.0.40
codegen_flags: <defaults>
</compile_context>

<pallas_src>
import functools

import jax
import jax.numpy as jnp
from jax import lax
from jax.experimental import pallas as pl
from jax.experimental.pallas import tpu as pltpu


def _spike_dense_rollout_kernel(vth, x_ref, w_ref, b_ref, tau_ref, mem0_ref,
                                mem_out_ref, spk_out_ref, mem_sc, alpha_sc):
    """One grid step == one SNN time step. Membrane state lives in mem_sc."""
    t = pl.program_id(0)

    @pl.when(t == 0)
    def _init():
        # Hoisted once per rollout: alpha = sigmoid(tau_m), membrane init.
        alpha_sc[...] = jax.nn.sigmoid(tau_ref[...])
        mem_sc[...] = mem0_ref[...]

    # Linear layer on the MXU: x_t (B, Din) bf16  x  W (Dout, Din) bf16,
    # contracting the trailing dim of both (no transposed weight copy),
    # accumulating in f32.
    d_input = lax.dot_general(
        x_ref[0], w_ref[...],
        dimension_numbers=(((1,), (1,)), ((), ())),
        preferred_element_type=jnp.float32) + b_ref[...]

    # LIF-style membrane update (no reset), all in f32 on the VPU.
    alpha = alpha_sc[...]
    mem_new = mem_sc[...] * alpha + (1.0 - alpha) * d_input
    mem_sc[...] = mem_new

    mem_out_ref[0] = mem_new
    # act_fun_adp forward: spike = (mem - v_th > 0).float()
    spk_out_ref[0] = (mem_new - vth > 0.0).astype(jnp.float32)


def spike_dense_test_origin_rollout(x_seq, weight, bias, tau_m, mem0, vth):
    """Fused T-step rollout.

    x_seq:  (T, B, Din) input spikes
    weight: (Dout, Din) nn.Linear weight (PyTorch layout, no transpose)
    bias:   (Dout,)
    tau_m:  (Dout,)
    mem0:   (B, Dout) initial membrane state
    vth:    python float threshold
    Returns (mems, spikes), each (T, B, Dout) float32.
    """
    T, B, Din = x_seq.shape
    Dout = weight.shape[0]

    x_bf = x_seq.astype(jnp.bfloat16)          # binary spikes: exact in bf16
    w_bf = weight.astype(jnp.bfloat16)
    b_row = bias.reshape(1, Dout).astype(jnp.float32)
    tau_row = tau_m.reshape(1, Dout).astype(jnp.float32)
    mem0 = mem0.astype(jnp.float32)

    kernel = functools.partial(_spike_dense_rollout_kernel, float(vth))

    grid_spec = pltpu.PrefetchScalarGridSpec(
        num_scalar_prefetch=0,
        grid=(T,),
        in_specs=[
            pl.BlockSpec((1, B, Din), lambda t: (t, 0, 0)),   # x_t (streamed)
            pl.BlockSpec((Dout, Din), lambda t: (0, 0)),      # weight (resident)
            pl.BlockSpec((1, Dout), lambda t: (0, 0)),        # bias (resident)
            pl.BlockSpec((1, Dout), lambda t: (0, 0)),        # tau_m (resident)
            pl.BlockSpec((B, Dout), lambda t: (0, 0)),        # mem0 (read once)
        ],
        out_specs=[
            pl.BlockSpec((1, B, Dout), lambda t: (t, 0, 0)),  # mem_t (streamed)
            pl.BlockSpec((1, B, Dout), lambda t: (t, 0, 0)),  # spike_t (streamed)
        ],
        scratch_shapes=[
            pltpu.VMEM((B, Dout), jnp.float32),   # membrane carry across steps
            pltpu.VMEM((1, Dout), jnp.float32),   # alpha = sigmoid(tau_m)
        ],
    )

    mems, spikes = pl.pallas_call(
        kernel,
        out_shape=(jax.ShapeDtypeStruct((T, B, Dout), jnp.float32),
                   jax.ShapeDtypeStruct((T, B, Dout), jnp.float32)),
        grid_spec=grid_spec,
        compiler_params=pltpu.CompilerParams(
            # time axis carries the membrane recurrence -> sequential
            dimension_semantics=("arbitrary",)),
    )(x_bf, w_bf, b_row, tau_row, mem0)
    return mems, spikes


def spike_dense_test_origin_step(x, weight, bias, tau_m, mem, vth):
    """Single forward step (== the PyTorch module's forward())."""
    mems, spikes = spike_dense_test_origin_rollout(
        x[None], weight, bias, tau_m, mem, vth)
    return mems[0], spikes[0]


def reference_rollout(x_seq, weight, bias, tau_m, mem0, vth):
    """Pure-JAX reference with the same bf16 matmul / f32 elementwise recipe."""
    alpha = jax.nn.sigmoid(tau_m.astype(jnp.float32))
    w_bf = weight.astype(jnp.bfloat16)
    b = bias.astype(jnp.float32)

    def step(mem, x_t):
        d_input = jnp.dot(x_t.astype(jnp.bfloat16), w_bf.T,
                          preferred_element_type=jnp.float32) + b
        mem_new = mem * alpha + (1.0 - alpha) * d_input
        spike = (mem_new - vth > 0.0).astype(jnp.float32)
        return mem_new, (mem_new, spike)

    _, (mems, spikes) = lax.scan(step, mem0.astype(jnp.float32), x_seq)
    return mems, spikes


if __name__ == "__main__":
    # Small shapes consistent with the module: T=16 steps, batch=8,
    # input_dim=64, output_dim=128.
    T, B, Din, Dout = 16, 8, 64, 128
    vth = 0.5
    low_m, high_m = 0.0, 4.0

    key = jax.random.PRNGKey(0)
    kx, kw, kb, ktau, kmem = jax.random.split(key, 5)

    # nn.Linear-style init: U(-1/sqrt(Din), 1/sqrt(Din))
    bound = 1.0 / (Din ** 0.5)
    weight = jax.random.uniform(kw, (Dout, Din), jnp.float32, -bound, bound)
    bias = jax.random.uniform(kb, (Dout,), jnp.float32, -bound, bound)
    # tau_m: uniform init in [low_m, high_m]
    tau_m = jax.random.uniform(ktau, (Dout,), jnp.float32, low_m, high_m)
    # set_neuron_state: mem ~ U(0,1)
    mem0 = jax.random.uniform(kmem, (B, Dout), jnp.float32)
    # Binary input spike train
    x_seq = (jax.random.uniform(kx, (T, B, Din)) > 0.5).astype(jnp.float32)

    mems, spikes = spike_dense_test_origin_rollout(
        x_seq, weight, bias, tau_m, mem0, vth)
    jax.block_until_ready((mems, spikes))

    mem_ref, spk_ref = reference_rollout(x_seq, weight, bias, tau_m, mem0, vth)
    assert jnp.allclose(mems, mem_ref, atol=1e-4, rtol=1e-4), "membrane mismatch"
    # Spikes must agree except possibly exactly at the threshold boundary.
    mismatch = spikes != spk_ref
    boundary = jnp.abs(mem_ref - vth) < 1e-3
    assert bool(jnp.all(jnp.logical_or(~mismatch, boundary))), "spike mismatch"

    # Single-step wrapper sanity check (== original module forward).
    m1, s1 = spike_dense_test_origin_step(x_seq[0], weight, bias, tau_m, mem0, vth)
    jax.block_until_ready((m1, s1))
    assert jnp.allclose(m1, mem_ref[0], atol=1e-4, rtol=1e-4)

    print("KERNEL_OK")
</pallas_src>

<mosaic_0001>
module attributes {stable_mosaic.version = 11 : i64} {
  func.func @_spike_dense_rollout_kernel(%arg0: i32, %arg1: memref<1x8x64xbf16, #tpu.memory_space<vmem>>, %arg2: memref<128x64xbf16, #tpu.memory_space<vmem>>, %arg3: memref<1x128xf32, #tpu.memory_space<vmem>>, %arg4: memref<1x128xf32, #tpu.memory_space<vmem>>, %arg5: memref<8x128xf32, #tpu.memory_space<vmem>>, %arg6: memref<1x8x128xf32, #tpu.memory_space<vmem>>, %arg7: memref<1x8x128xf32, #tpu.memory_space<vmem>>, %arg8: memref<8x128xf32, #tpu.memory_space<vmem>>, %arg9: memref<1x128xf32, #tpu.memory_space<vmem>>) attributes {dimension_semantics = [#tpu.dimension_semantics<arbitrary>], iteration_bounds = array<i64: 16>, scalar_prefetch = 0 : i64, scratch_operands = 2 : i64, tpu.core_type = #tpu.core_type<tc>, window_params = [{transform_indices = @transform_0, window_bounds = array<i64: 1, 8, 64>}, {pipeline_mode = #tpu.pipeline_mode<synchronous>, transform_indices = @transform_1, window_bounds = array<i64: 128, 64>}, {pipeline_mode = #tpu.pipeline_mode<synchronous>, transform_indices = @transform_2, window_bounds = array<i64: 1, 128>}, {pipeline_mode = #tpu.pipeline_mode<synchronous>, transform_indices = @transform_3, window_bounds = array<i64: 1, 128>}, {pipeline_mode = #tpu.pipeline_mode<synchronous>, transform_indices = @transform_4, window_bounds = array<i64: 8, 128>}, {transform_indices = @transform_5, window_bounds = array<i64: 1, 8, 128>}, {transform_indices = @transform_6, window_bounds = array<i64: 1, 8, 128>}]} {
    %c0_i32 = arith.constant 0 : i32
    %0 = arith.cmpi eq, %arg0, %c0_i32 : i32
    %1 = arith.extui %0 : i1 to i32
    %c0_i32_0 = arith.constant 0 : i32
    %2 = arith.cmpi ne, %1, %c0_i32_0 : i32
    scf.if %2 {
      %c0_22 = arith.constant 0 : index
      %c0_23 = arith.constant 0 : index
      %32 = vector.load %arg4[%c0_22, %c0_23] : memref<1x128xf32, #tpu.memory_space<vmem>>, vector<1x128xf32>
      %33 = arith.negf %32 : vector<1x128xf32>
      %34 = math.exp %33 : vector<1x128xf32>
      %cst_24 = arith.constant 1.000000e+00 : f32
      %35 = vector.broadcast %cst_24 : f32 to vector<1x128xf32>
      %36 = arith.addf %35, %34 : vector<1x128xf32>
      %37 = arith.divf %35, %36 : vector<1x128xf32>
      %c0_25 = arith.constant 0 : index
      %c0_26 = arith.constant 0 : index
      %38 = vector.load %arg9[%c0_25, %c0_26] : memref<1x128xf32, #tpu.memory_space<vmem>>, vector<1x128xf32>
      tpu.vector_store %arg9[%c0_25, %c0_26], %37 {strides = array<i32>} : memref<1x128xf32, #tpu.memory_space<vmem>>, vector<1x128xf32>,
      %c0_27 = arith.constant 0 : index
      %c0_28 = arith.constant 0 : index
      %39 = vector.load %arg5[%c0_27, %c0_28] : memref<8x128xf32, #tpu.memory_space<vmem>>, vector<8x128xf32>
      %c0_29 = arith.constant 0 : index
      %c0_30 = arith.constant 0 : index
      %40 = vector.load %arg8[%c0_29, %c0_30] : memref<8x128xf32, #tpu.memory_space<vmem>>, vector<8x128xf32>
      tpu.vector_store %arg8[%c0_29, %c0_30], %39 {strides = array<i32>} : memref<8x128xf32, #tpu.memory_space<vmem>>, vector<8x128xf32>,
    } else {
    }
    %c0 = arith.constant 0 : index
    %c0_1 = arith.constant 0 : index
    %c0_2 = arith.constant 0 : index
    %3 = vector.load %arg1[%c0, %c0_1, %c0_2] : memref<1x8x64xbf16, #tpu.memory_space<vmem>>, vector<1x8x64xbf16>
    %4 = vector.shape_cast %3 : vector<1x8x64xbf16> to vector<8x64xbf16>
    %c0_3 = arith.constant 0 : index
    %c0_4 = arith.constant 0 : index
    %5 = vector.load %arg2[%c0_3, %c0_4] : memref<128x64xbf16, #tpu.memory_space<vmem>>, vector<128x64xbf16>
    %cst = arith.constant dense<0.000000e+00> : vector<8x128xf32>
    %6 = tpu.matmul %4, %5, %cst {dimension_numbers = #tpu.dot_dimension_numbers<[1], [1], [0], [0], [0, 0, 1, 0], [], []>} : vector<8x64xbf16>, vector<128x64xbf16>, vector<8x128xf32> -> vector<8x128xf32>
    %c0_5 = arith.constant 0 : index
    %c0_6 = arith.constant 0 : index
    %7 = vector.load %arg3[%c0_5, %c0_6] : memref<1x128xf32, #tpu.memory_space<vmem>>, vector<1x128xf32>
    %8 = vector.broadcast %7 : vector<1x128xf32> to vector<8x128xf32>
    %9 = arith.addf %6, %8 : vector<8x128xf32>
    %c0_7 = arith.constant 0 : index
    %c0_8 = arith.constant 0 : index
    %10 = vector.load %arg9[%c0_7, %c0_8] : memref<1x128xf32, #tpu.memory_space<vmem>>, vector<1x128xf32>
    %c0_9 = arith.constant 0 : index
    %c0_10 = arith.constant 0 : index
    %11 = vector.load %arg8[%c0_9, %c0_10] : memref<8x128xf32, #tpu.memory_space<vmem>>, vector<8x128xf32>
    %12 = vector.broadcast %10 : vector<1x128xf32> to vector<8x128xf32>
    %13 = arith.mulf %11, %12 : vector<8x128xf32>
    %cst_11 = arith.constant 1.000000e+00 : f32
    %14 = vector.broadcast %cst_11 : f32 to vector<1x128xf32>
    %15 = arith.subf %14, %10 : vector<1x128xf32>
    %16 = vector.broadcast %15 : vector<1x128xf32> to vector<8x128xf32>
    %17 = arith.mulf %16, %9 : vector<8x128xf32>
    %18 = arith.addf %13, %17 : vector<8x128xf32>
    %c0_12 = arith.constant 0 : index
    %c0_13 = arith.constant 0 : index
    %19 = vector.load %arg8[%c0_12, %c0_13] : memref<8x128xf32, #tpu.memory_space<vmem>>, vector<8x128xf32>
    tpu.vector_store %arg8[%c0_12, %c0_13], %18 {strides = array<i32>} : memref<8x128xf32, #tpu.memory_space<vmem>>, vector<8x128xf32>,
    %c0_14 = arith.constant 0 : index
    %c0_15 = arith.constant 0 : index
    %c0_16 = arith.constant 0 : index
    %20 = vector.load %arg6[%c0_14, %c0_15, %c0_16] : memref<1x8x128xf32, #tpu.memory_space<vmem>>, vector<1x8x128xf32>
    %21 = vector.shape_cast %20 : vector<1x8x128xf32> to vector<8x128xf32>
    %22 = vector.shape_cast %18 : vector<8x128xf32> to vector<1x8x128xf32>
    tpu.vector_store %arg6[%c0_14, %c0_15, %c0_16], %22 {strides = array<i32>} : memref<1x8x128xf32, #tpu.memory_space<vmem>>, vector<1x8x128xf32>,
    %cst_17 = arith.constant 5.000000e-01 : f32
    %23 = vector.broadcast %cst_17 : f32 to vector<8x128xf32>
    %24 = arith.subf %18, %23 : vector<8x128xf32>
    %cst_18 = arith.constant 0.000000e+00 : f32
    %25 = vector.broadcast %cst_18 : f32 to vector<8x128xf32>
    %26 = arith.cmpf ogt, %24, %25 : vector<8x128xf32>
    %27 = arith.extui %26 : vector<8x128xi1> to vector<8x128xi32>
    %28 = arith.sitofp %27 : vector<8x128xi32> to vector<8x128xf32>
    %c0_19 = arith.constant 0 : index
    %c0_20 = arith.constant 0 : index
    %c0_21 = arith.constant 0 : index
    %29 = vector.load %arg7[%c0_19, %c0_20, %c0_21] : memref<1x8x128xf32, #tpu.memory_space<vmem>>, vector<1x8x128xf32>
    %30 = vector.shape_cast %29 : vector<1x8x128xf32> to vector<8x128xf32>
    %31 = vector.shape_cast %28 : vector<8x128xf32> to vector<1x8x128xf32>
    tpu.vector_store %arg7[%c0_19, %c0_20, %c0_21], %31 {strides = array<i32>} : memref<1x8x128xf32, #tpu.memory_space<vmem>>, vector<1x8x128xf32>,
    return
  }
  func.func @transform_0(%arg0: i32) -> (i32, i32, i32) {
    %c0_i32 = arith.constant 0 : i32
    %c0_i32_0 = arith.constant 0 : i32
    %c0_i32_1 = arith.constant 0 : i32
    return %arg0, %c0_i32, %c0_i32_0 : i32, i32, i32
  }
  func.func @transform_1(%arg0: i32) -> (i32, i32) {
    %c0_i32 = arith.constant 0 : i32
    %c0_i32_0 = arith.constant 0 : i32
    %c0_i32_1 = arith.constant 0 : i32
    return %c0_i32, %c0_i32_0 : i32, i32
  }
  func.func @transform_2(%arg0: i32) -> (i32, i32) {
    %c0_i32 = arith.constant 0 : i32
    %c0_i32_0 = arith.constant 0 : i32
    %c0_i32_1 = arith.constant 0 : i32
    return %c0_i32, %c0_i32_0 : i32, i32
  }
  func.func @transform_3(%arg0: i32) -> (i32, i32) {
    %c0_i32 = arith.constant 0 : i32
    %c0_i32_0 = arith.constant 0 : i32
    %c0_i32_1 = arith.constant 0 : i32
    return %c0_i32, %c0_i32_0 : i32, i32
  }
  func.func @transform_4(%arg0: i32) -> (i32, i32) {
    %c0_i32 = arith.constant 0 : i32
    %c0_i32_0 = arith.constant 0 : i32
    %c0_i32_1 = arith.constant 0 : i32
    return %c0_i32, %c0_i32_0 : i32, i32
  }
  func.func @transform_5(%arg0: i32) -> (i32, i32, i32) {
    %c0_i32 = arith.constant 0 : i32
    %c0_i32_0 = arith.constant 0 : i32
    %c0_i32_1 = arith.constant 0 : i32
    return %arg0, %c0_i32, %c0_i32_0 : i32, i32, i32
  }
  func.func @transform_6(%arg0: i32) -> (i32, i32, i32) {
    %c0_i32 = arith.constant 0 : i32
    %c0_i32_0 = arith.constant 0 : i32
    %c0_i32_1 = arith.constant 0 : i32
    return %arg0, %c0_i32, %c0_i32_0 : i32, i32, i32
  }
}

</mosaic_0001>

<llo_original>
// kernel: tpu_custom_call.1
$region0: #{tpu_custom_call.1}
  #allocation0 [shape = 'u32[]', space=smem, size = 0x4, offset = 0x4, fixed_abs, tag = 'smem constant byte address 0x4 - core index']
  #allocation1 [shape = 'u32[144,128]{1,0:T(1,128)}', space=vmem, size = 0x12000, scoped, tag = 'internal scratch']
  #allocation2 [shape = 'f32[8,128]{1,0:T(8,128)}', space=vmem, size = 0x1000, scoped, tag = 'scratch operand']
  #allocation3 [shape = 'f32[1,128]{1,0:T(1,128)}', space=vmem, size = 0x200, scoped, tag = 'scratch operand']
  %s0 = inlined_call_operand.vmem [shape: bf16[16,8,64], index: 0, kind: input, shape index: {}]
  %s1 = inlined_call_operand.vmem [shape: bf16[128,64], index: 1, kind: input, shape index: {}]
  %s2 = inlined_call_operand.vmem [shape: f32[1,128], index: 2, kind: input, shape index: {}]
  %s3 = inlined_call_operand.vmem [shape: f32[1,128], index: 3, kind: input, shape index: {}]
  %s4 = inlined_call_operand.vmem [shape: f32[8,128], index: 4, kind: input, shape index: {}]
  %s5 = inlined_call_operand.hbm [shape: f32[16,8,128], index: 5, kind: output, shape index: {0}]
  %s6 = inlined_call_operand.hbm [shape: f32[16,8,128], index: 6, kind: output, shape index: {1}]
  %7 = xla_tuple %s5, %s6
  %s8 = sld [smem:[#allocation0]]
  $region65: #{tpu_custom_call.1} parent=0
    _
  %s10 = ssub.s32 1, %s8
  %s11 = scalar_select 0, %s10, %s8
  $region1: #{tpu_custom_call.1} parent=0
    #allocation4 [shape = 'u8[8192]{0}', space=vmem, size = 0x2000, scoped, tag = 'output window, operand 0']
    #allocation5 [shape = 's32[2]{0}', space=sflag, size = 0x8, scoped, tag = 'scoped memory for tpu_custom_call.1']
    #allocation6 [shape = 'u8[8192]{0}', space=vmem, size = 0x2000, scoped, tag = 'output window, operand 1']
    #allocation7 [shape = 's32[2]{0}', space=sflag, size = 0x8, scoped, tag = 'scoped memory for tpu_custom_call.1']
    %12 = vsyncpa [#allocation5], 0
    %s13 = scalar_lea.sflag [#allocation5], 1
    %14 = vsyncpa %s13, 0
    %15 = vsyncpa [#allocation7], 0
    %s16 = scalar_lea.sflag [#allocation7], 1
    %17 = vsyncpa %s16, 0
    loop: start=0, step=1, limit=18
    $region2: #{tpu_custom_call.1} parent=1 // loop_pre_header
      _
    $region3: #{tpu_custom_call.1} parent=1 // loop_header
      %s19 = sphi 0, %s23
      %p20 = scmp.ge.s32.totalorder %s19, 18
      %s29 = sphi 0, %s31
      %s32 = sphi 0, %s29
      %s33 = sphi 0, %s32
      %s49 = sphi 0, %s33
      %s53 = sphi 0, %s53
      %s55 = sphi 0, %s53
      %s56 = sphi 0, %s55
      %s70 = sphi 0, %s56
      %s74 = sphi 0, %s74
      %s76 = sphi 0, %s74
      %s77 = sphi 0, %s76
      %s91 = sphi 0, %s77
      %s95 = sphi 0, %s95
      %s97 = sphi 0, %s95
      %s98 = sphi 0, %s97
      %s112 = sphi 0, %s98
      %s116 = sphi 0, %s116
      %s118 = sphi 0, %s116
      %s119 = sphi 0, %s118
      %s133 = sphi 0, %s119
      %s139 = sphi 0, %s141
      %s142 = sphi 0, %s139
      %s143 = sphi 0, %s142
      %s159 = sphi 0, %s143
      %s165 = sphi 0, %s167
      %s168 = sphi 0, %s165
      %s169 = sphi 0, %s168
      %s185 = sphi 0, %s169
    $region4: #{tpu_custom_call.1} parent=1 // loop_header_branch
      %22 = sbr.rel (%p20) target = $region8
    $region5: #{tpu_custom_call.1} parent=1 // loop_body
      %s24 = ssub.s32 %s19, 1
      %s25 = ssub.s32 %s19, 2
      %s26 = sadd.s32 %s19, 1
      %s27 = ssub.s32 %s19, %s26
      %p28 = scmp.eq.s32.totalorder %s27, 0
      %s30 = sadd.s32 %s29, 1
      %s31 = scalar_select %p28, %s29, %s30
      %p34 = pneg %p28
      %p35 = scmp.eq.s32.totalorder %s19, 15
      %p36 = por %p34, %p35
      %p37 = scmp.ne.s32.totalorder %s29, %s32
      %p38 = scmp.eq.s32.totalorder %s19, 0
      %p39 = por %p37, %p38
      %p40 = scmp.ne.s32.totalorder %s29, %s32
      %p41 = scmp.eq.s32.totalorder %s24, 15
      %p42 = por %p40, %p41
      %p43 = scmp.ne.s32.totalorder %s32, %s33
      %p44 = scmp.eq.s32.totalorder %s24, 0
      %p45 = por %p43, %p44
      %p46 = scmp.ne.s32.totalorder %s32, %s33
      %p47 = scmp.eq.s32.totalorder %s25, 15
      %p48 = por %p46, %p47
      %p50 = scmp.ne.s32.totalorder %s33, %s49
      %p51 = scmp.eq.s32.totalorder %s25, 0
      %p52 = por %p50, %p51
      %s54 = sadd.s32 %s53, 1
      %p57 = scmp.eq.s32.totalorder %s19, 15
      %p58 = scmp.ne.s32.totalorder %s53, %s55
      %p59 = scmp.eq.s32.totalorder %s19, 0
      %p60 = por %p58, %p59
      %p61 = scmp.ne.s32.totalorder %s53, %s55
      %p62 = scmp.eq.s32.totalorder %s24, 15
      %p63 = por %p61, %p62
      %p64 = scmp.ne.s32.totalorder %s55, %s56
      %p65 = scmp.eq.s32.totalorder %s24, 0
      %p66 = por %p64, %p65
      %p67 = scmp.ne.s32.totalorder %s55, %s56
      %p68 = scmp.eq.s32.totalorder %s25, 15
      %p69 = por %p67, %p68
      %p71 = scmp.ne.s32.totalorder %s56, %s70
      %p72 = scmp.eq.s32.totalorder %s25, 0
      %p73 = por %p71, %p72
      %s75 = sadd.s32 %s74, 1
      %p78 = scmp.eq.s32.totalorder %s19, 15
      %p79 = scmp.ne.s32.totalorder %s74, %s76
      %p80 = scmp.eq.s32.totalorder %s19, 0
      %p81 = por %p79, %p80
      %p82 = scmp.ne.s32.totalorder %s74, %s76
      %p83 = scmp.eq.s32.totalorder %s24, 15
      %p84 = por %p82, %p83
      %p85 = scmp.ne.s32.totalorder %s76, %s77
      %p86 = scmp.eq.s32.totalorder %s24, 0
      %p87 = por %p85, %p86
      %p88 = scmp.ne.s32.totalorder %s76, %s77
      %p89 = scmp.eq.s32.totalorder %s25, 15
      %p90 = por %p88, %p89
      %p92 = scmp.ne.s32.totalorder %s77, %s91
      %p93 = scmp.eq.s32.totalorder %s25, 0
      %p94 = por %p92, %p93
      %s96 = sadd.s32 %s95, 1
      %p99 = scmp.eq.s32.totalorder %s19, 15
      %p100 = scmp.ne.s32.totalorder %s95, %s97
      %p101 = scmp.eq.s32.totalorder %s19, 0
      %p102 = por %p100, %p101
      %p103 = scmp.ne.s32.totalorder %s95, %s97
      %p104 = scmp.eq.s32.totalorder %s24, 15
      %p105 = por %p103, %p104
      %p106 = scmp.ne.s32.totalorder %s97, %s98
      %p107 = scmp.eq.s32.totalorder %s24, 0
      %p108 = por %p106, %p107
      %p109 = scmp.ne.s32.totalorder %s97, %s98
      %p110 = scmp.eq.s32.totalorder %s25, 15
      %p111 = por %p109, %p110
      %p113 = scmp.ne.s32.totalorder %s98, %s112
      %p114 = scmp.eq.s32.totalorder %s25, 0
      %p115 = por %p113, %p114
      %s117 = sadd.s32 %s116, 1
      %p120 = scmp.eq.s32.totalorder %s19, 15
      %p121 = scmp.ne.s32.totalorder %s116, %s118
      %p122 = scmp.eq.s32.totalorder %s19, 0
      %p123 = por %p121, %p122
      %p124 = scmp.ne.s32.totalorder %s116, %s118
      %p125 = scmp.eq.s32.totalorder %s24, 15
      %p126 = por %p124, %p125
      %p127 = scmp.ne.s32.totalorder %s118, %s119
      %p128 = scmp.eq.s32.totalorder %s24, 0
      %p129 = por %p127, %p128
      %p130 = scmp.ne.s32.totalorder %s118, %s119
      %p131 = scmp.eq.s32.totalorder %s25, 15
      %p132 = por %p130, %p131
      %p134 = scmp.ne.s32.totalorder %s119, %s133
      %p135 = scmp.eq.s32.totalorder %s25, 0
      %p136 = por %p134, %p135
      %s137 = ssub.s32 %s19, %s26
      %p138 = scmp.eq.s32.totalorder %s137, 0
      %s140 = sadd.s32 %s139, 1
      %s141 = scalar_select %p138, %s139, %s140
      %p144 = pneg %p138
      %p145 = scmp.eq.s32.totalorder %s19, 15
      %p146 = por %p144, %p145
      %p147 = scmp.ne.s32.totalorder %s139, %s142
      %p148 = scmp.eq.s32.totalorder %s19, 0
      %p149 = por %p147, %p148
      %p150 = scmp.ne.s32.totalorder %s139, %s142
      %p151 = scmp.eq.s32.totalorder %s24, 15
      %p152 = por %p150, %p151
      %p153 = scmp.ne.s32.totalorder %s142, %s143
      %p154 = scmp.eq.s32.totalorder %s24, 0
      %p155 = por %p153, %p154
      %p156 = scmp.ne.s32.totalorder %s142, %s143
      %p157 = scmp.eq.s32.totalorder %s25, 15
      %p158 = por %p156, %p157
      %p160 = scmp.ne.s32.totalorder %s143, %s159
      %p161 = scmp.eq.s32.totalorder %s25, 0
      %p162 = por %p160, %p161
      %s163 = ssub.s32 %s19, %s26
      %p164 = scmp.eq.s32.totalorder %s163, 0
      %s166 = sadd.s32 %s165, 1
      %s167 = scalar_select %p164, %s165, %s166
      %p170 = pneg %p164
      %p171 = scmp.eq.s32.totalorder %s19, 15
      %p172 = por %p170, %p171
      %p173 = scmp.ne.s32.totalorder %s165, %s168
      %p174 = scmp.eq.s32.totalorder %s19, 0
      %p175 = por %p173, %p174
      %p176 = scmp.ne.s32.totalorder %s165, %s168
      %p177 = scmp.eq.s32.totalorder %s24, 15
      %p178 = por %p176, %p177
      %p179 = scmp.ne.s32.totalorder %s168, %s169
      %p180 = scmp.eq.s32.totalorder %s24, 0
      %p181 = por %p179, %p180
      %p182 = scmp.ne.s32.totalorder %s168, %s169
      %p183 = scmp.eq.s32.totalorder %s25, 15
      %p184 = por %p182, %p183
      %p186 = scmp.ne.s32.totalorder %s169, %s185
      %p187 = scmp.eq.s32.totalorder %s25, 0
      %p188 = por %p186, %p187
      %p189 = scmp.le.s32.totalorder 1, %s19
      %p190 = scmp.lt.s32.totalorder %s19, 17
      %p191 = pnand %p189, %p190
      %p192 = pneg %p191
      // Predicated region
      $region9: #{tpu_custom_call.1} parent=5 // pred_check
        _
      $region10: #{tpu_custom_call.1} parent=5 // pred_check_branch
        %194 = sbr.rel (%p191) target = $region12
      $region11: #{tpu_custom_call.1} parent=5 // pred_region
        %s195 = ssub.s32 %s19, 1
        // Predicated region
        $region13: #{tpu_custom_call.1} parent=11 // pred_check
          %p196 = pneg %p66
        $region14: #{tpu_custom_call.1} parent=11 // pred_check_branch
          %198 = sbr.rel (%p196) target = $region16
        $region15: #{tpu_custom_call.1} parent=11 // pred_region
          _
        $region16: #{tpu_custom_call.1} parent=11 // pred_fallthru
          _
        // Predicated region
        $region17: #{tpu_custom_call.1} parent=11 // pred_check
          %p199 = pneg %p87
        $region18: #{tpu_custom_call.1} parent=11 // pred_check_branch
          %201 = sbr.rel (%p199) target = $region20
        $region19: #{tpu_custom_call.1} parent=11 // pred_region
          _
        $region20: #{tpu_custom_call.1} parent=11 // pred_fallthru
          _
        // Predicated region
        $region21: #{tpu_custom_call.1} parent=11 // pred_check
          %p202 = pneg %p108
        $region22: #{tpu_custom_call.1} parent=11 // pred_check_branch
          %204 = sbr.rel (%p202) target = $region24
        $region23: #{tpu_custom_call.1} parent=11 // pred_region
          _
        $region24: #{tpu_custom_call.1} parent=11 // pred_fallthru
          _
        // Predicated region
        $region25: #{tpu_custom_call.1} parent=11 // pred_check
          %p205 = pneg %p129
        $region26: #{tpu_custom_call.1} parent=11 // pred_check_branch
          %207 = sbr.rel (%p205) target = $region28
        $region27: #{tpu_custom_call.1} parent=11 // pred_region
          _
        $region28: #{tpu_custom_call.1} parent=11 // pred_fallthru
          _
      $region12: #{tpu_custom_call.1} parent=5 // pred_fallthru
        _
      %p208 = scmp.lt.s32.totalorder %s19, 16
      // Predicated region
      $region29: #{tpu_custom_call.1} parent=5 // pred_check
        %p209 = pneg %p208
      $region30: #{tpu_custom_call.1} parent=5 // pred_check_branch
        %211 = sbr.rel (%p209) target = $region32
      $region31: #{tpu_custom_call.1} parent=5 // pred_region
        // Predicated region
        $region33: #{tpu_custom_call.1} parent=31 // pred_check
          %p212 = pneg %p39
        $region34: #{tpu_custom_call.1} parent=31 // pred_check_branch
          %214 = sbr.rel (%p212) target = $region36
        $region35: #{tpu_custom_call.1} parent=31 // pred_region
          %p215 = scmp.lt.s32.totalorder %s19, 15
          %s216 = scalar_select %p215, %s19, 15
          %s217 = smul.addr %s216, 4
          %s218 = scalar_lea.vmem %s0, %s217
        $region36: #{tpu_custom_call.1} parent=31 // pred_fallthru
          _
      $region32: #{tpu_custom_call.1} parent=5 // pred_fallthru
        _
      %p219 = scmp.le.s32.totalorder 1, %s19
      %p220 = scmp.lt.s32.totalorder %s19, 17
      %p221 = pnand %p219, %p220
      %p222 = pneg %p221
      // Predicated region
      $region37: #{tpu_custom_call.1} parent=5 // pred_check
        _
      $region38: #{tpu_custom_call.1} parent=5 // pred_check_branch
        %224 = sbr.rel (%p221) target = $region40
      $region39: #{tpu_custom_call.1} parent=5 // pred_region
        %s225 = ssub.s32 %s19, 1
        %p226 = scmp.lt.s32.totalorder %s24, 15
        %s227 = scalar_select %p226, %s24, 15
        %s228 = smul.addr %s227, 4
        %s229 = scalar_lea.vmem %s0, %s228
        %p230 = pneg %p45
        %p231 = pneg %p42
        %p232 = pneg %p66
        %p233 = pneg %p63
        %p234 = pneg %p87
        %p235 = pneg %p84
        %p236 = pneg %p108
        %p237 = pneg %p105
        %p238 = pneg %p129
        %p239 = pneg %p126
        %p240 = pneg %p155
        %p241 = pneg %p152
        %s242 = sand.u32 %s142, 1
        %s243 = scalar_lea.sflag [#allocation5], %s242
        %s244 = sand.u32 %s142, 1
        %s245 = smul.addr %s244, 8
        %s246 = scalar_lea.vmem [#allocation4], %s245
        %p247 = pneg %p181
        %p248 = pneg %p178
        %s249 = sand.u32 %s168, 1
        %s250 = scalar_lea.sflag [#allocation7], %s249
        %s251 = sand.u32 %s168, 1
        %s252 = smul.addr %s251, 8
        %s253 = scalar_lea.vmem [#allocation6], %s252
        %p254 = scmp.lt.s32.totalorder %s24, 15
        %s255 = scalar_select %p254, %s24, 15
        %s256 = smul.addr %s255, 4
        %s257 = scalar_lea.vmem %s0, %s256
        %p259 = scmp.eq.s32.totalorder %s24, 0
        // Predicated region
        $region41: #{tpu_custom_call.1} parent=39 // pred_check
          %p260 = pneg %p259
        $region42: #{tpu_custom_call.1} parent=39 // pred_check_branch
          %262 = sbr.rel (%p260) target = $region44
        $region43: #{tpu_custom_call.1} parent=39 // pred_region
          %v263 = vld [vmem:[%s3] sm:$0x1]
          %v264 = vxor.u32 %v263, 2147483648
          %v265 = vmul.f32 %v264, 1.442695
          %v266 = vpow.pop %v265
          %v267 = vadd.f32 %v266, 1.0
          %v268 = vrcp.pop %v267
          %v269 = vmul.f32 1.0, %v268
          %270 = vst [vmem:[#allocation3] sm:$0x1] %v269
          %v271 = vld [vmem:[%s4] sm:$0xff]
          %272 = vst [vmem:[#allocation2] sm:$0xff] %v271
        $region44: #{tpu_custom_call.1} parent=39 // pred_fallthru
          _
        %v273 = vld [vmem:[%s257] sm:$0xf]
        %v274 = vld [vmem:[%s1] sm:$0xf]
        %v275 = vld [vmem:[%s1 + $0x4] sm:$0xf]
        %v276 = vld [vmem:[%s1 + $0x8] sm:$0xf]
        %v277 = vld [vmem:[%s1 + $0xc] sm:$0xf]
        %v278 = vld [vmem:[%s1 + $0x10] sm:$0xf]
        %v279 = vld [vmem:[%s1 + $0x14] sm:$0xf]
        %v280 = vld [vmem:[%s1 + $0x18] sm:$0xf]
        %v281 = vld [vmem:[%s1 + $0x1c] sm:$0xf]
        %v282 = vld [vmem:[%s1 + $0x20] sm:$0xf]
        %v283 = vld [vmem:[%s1 + $0x24] sm:$0xf]
        %v284 = vld [vmem:[%s1 + $0x28] sm:$0xf]
        %v285 = vld [vmem:[%s1 + $0x2c] sm:$0xf]
        %v286 = vld [vmem:[%s1 + $0x30] sm:$0xf]
        %v287 = vld [vmem:[%s1 + $0x34] sm:$0xf]
        %v288 = vld [vmem:[%s1 + $0x38] sm:$0xf]
        %v289 = vld [vmem:[%s1 + $0x3c] sm:$0xf]
        %v290 = vld [vmem:[%s2] sm:$0x1]
        %v292 = vlaneseq
        %v293 = vshrl.u32 %v292, 7
        %v294 = vsub.s32 0, %v293
        %v295 = vrot.slane %v290, %v294
        %v313 = vunpack.c.l.b16 %v274
        %v314 = vunpack.c.l.b16 %v275
        %v315 = vunpack.c.l.b16 %v276
        %v316 = vunpack.c.l.b16 %v277
        %v317 = vunpack.c.l.b16 %v278
        %v318 = vunpack.c.l.b16 %v279
        %v319 = vunpack.c.l.b16 %v280
        %v320 = vunpack.c.l.b16 %v281
        %v321 = vunpack.c.l.b16 %v282
        %v322 = vunpack.c.l.b16 %v283
        %v323 = vunpack.c.l.b16 %v284
        %v324 = vunpack.c.l.b16 %v285
        %v325 = vunpack.c.l.b16 %v286
        %v326 = vunpack.c.l.b16 %v287
        %v327 = vunpack.c.l.b16 %v288
        %v328 = vunpack.c.l.b16 %v289
        %v329 = vpack.c.b16 %v314, %v313
        %v330 = vpack.c.b16 %v316, %v315
        %v331 = vpack.c.b16 %v318, %v317
        %v332 = vpack.c.b16 %v320, %v319
        %v333 = vpack.c.b16 %v322, %v321
        %v334 = vpack.c.b16 %v324, %v323
        %v335 = vpack.c.b16 %v326, %v325
        %v336 = vpack.c.b16 %v328, %v327
        %vm337 = vcmask 523264
        %v339 = vsel %vm337, %v273, 0
        %v342 = vsel %vm337, %v329, 0
        %v345 = vsel %vm337, %v330, 0
        %v348 = vsel %vm337, %v331, 0
        %v351 = vsel %vm337, %v332, 0
        %v354 = vsel %vm337, %v333, 0
        %v357 = vsel %vm337, %v334, 0
        %v360 = vsel %vm337, %v335, 0
        %v363 = vsel %vm337, %v336, 0
        %365 = vmatprep.subr.bf16.mxu0 0
        %366 = vmatpush1.bf16.xpose.msra.mxu0 %v342
        %367 = vmatprep.subr.bf16.mxu0 0
        %368 = vmatpush1.bf16.xpose.msra.mxu0 %v345
        %369 = vmatprep.subr.bf16.mxu0 0
        %370 = vmatpush1.bf16.xpose.msra.mxu0 %v348
        %371 = vmatprep.subr.bf16.mxu0 0
        %372 = vmatpush1.bf16.xpose.msra.mxu0 %v351
        %373 = vmatprep.subr.bf16.mxu0 0
        %374 = vmatpush1.bf16.xpose.msra.mxu0 %v354
        %375 = vmatprep.subr.bf16.mxu0 0
        %376 = vmatpush1.bf16.xpose.msra.mxu0 %v357
        %377 = vmatprep.subr.bf16.mxu0 0
        %378 = vmatpush1.bf16.xpose.msra.mxu0 %v360
        %379 = vmatprep.subr.bf16.mxu0 0
        %380 = vmatpush1.bf16.xpose.msra.mxu0 %v363
        %381 = vmatprep.subr.bf16.mxu0 0
        %382 = vmatpush1.bf16.xpose.msra.mxu0 0
        %383 = vmatprep.subr.bf16.mxu0 0
        %384 = vmatpush1.bf16.xpose.msra.mxu0 0
        %385 = vmatprep.subr.bf16.mxu0 0
        %386 = vmatpush1.bf16.xpose.msra.mxu0 0
        %387 = vmatprep.subr.bf16.mxu0 0
        %388 = vmatpush1.bf16.xpose.msra.mxu0 0
        %389 = vmatprep.subr.bf16.mxu0 0
        %390 = vmatpush1.bf16.xpose.msra.mxu0 0
        %391 = vmatprep.subr.bf16.mxu0 0
        %392 = vmatpush1.bf16.xpose.msra.mxu0 0
        %393 = vmatprep.subr.bf16.mxu0 0
        %394 = vmatpush1.bf16.xpose.msra.mxu0 0
        %395 = vmatprep.subr.bf16.mxu0 0
        %396 = vmatpush1.bf16.xpose.msra.mxu0 0
        %397 = vmatprep.mubr.bf16.mxu0 0
        %398 = vmatmul.mubr.bf16.gmra.mrb[0].mxu0 %v339
        %v399 = vpop.f32.mrb[0].mxu0
        %v400 = vadd.f32 %v295, %v399
        %v401 = vpop.f32.mrb[0].mxu0
        %v402 = vpop.f32.mrb[0].mxu0
        %v403 = vpop.f32.mrb[0].mxu0
        %404 = vdwg.mxu0
        %v405 = vld [vmem:[#allocation3] sm:$0x1]
        %v406 = vld [vmem:[#allocation2] sm:$0xff]
        %v408 = vlaneseq
        %v409 = vshrl.u32 %v408, 7
        %v410 = vsub.s32 0, %v409
        %v411 = vrot.slane %v405, %v410
        %v413 = vmul.f32 %v406, %v411
        %v414 = vsub.f32 1.0, %v405
        %v416 = vlaneseq
        %v417 = vshrl.u32 %v416, 7
        %v418 = vsub.s32 0, %v417
        %v419 = vrot.slane %v414, %v418
        %v421 = vmul.f32 %v419, %v400
        %v422 = vadd.f32 %v413, %v421
        %423 = vst [vmem:[#allocation2] sm:$0xff] %v422
        %424 = vst [vmem:[%s246] sm:$0xff] %v422
        %v425 = vsub.f32 %v422, 0.5
        %vm426 = vcmp.gt.f32.partialorder %v425, 0.0
        %v427 = vsel %vm426, 1, 0
        %v428 = vcvt.s32.f32 %v427
        %429 = vst [vmem:[%s253] sm:$0xff] %v428
        %s430 = sand.u32 %s142, 1
        %s431 = scalar_lea.sflag [#allocation5], %s430
        %s432 = sand.u32 %s142, 1
        %s433 = smul.addr %s432, 8
        %s434 = scalar_lea.vmem [#allocation4], %s433
        %s435 = sand.u32 %s168, 1
        %s436 = scalar_lea.sflag [#allocation7], %s435
        %s437 = sand.u32 %s168, 1
        %s438 = smul.addr %s437, 8
        %s439 = scalar_lea.vmem [#allocation6], %s438
        // Predicated region
        $region45: #{tpu_custom_call.1} parent=39 // pred_check
          %p440 = pneg %p152
        $region46: #{tpu_custom_call.1} parent=39 // pred_check_branch
          %442 = sbr.rel (%p440) target = $region48
        $region47: #{tpu_custom_call.1} parent=39 // pred_region
          %s444 = ssub.s32 128, 128
          %445 = vsyncadd %s431, %s444
          %s446 = smul.addr %s24, 128
          %s447 = scalar_lea.hbm %s5, %s446
          %s449 = sshll.u32 %s434, 4
          %s450 = int_to_ptr.vmem [resolvable:$true] %s449
          %452 = dma.vmem_to_hbm [thread:$0]  %s450, 128, %s447, %s431
        $region48: #{tpu_custom_call.1} parent=39 // pred_fallthru
          _
        // Predicated region
        $region49: #{tpu_custom_call.1} parent=39 // pred_check
          %p453 = pneg %p178
        $region50: #{tpu_custom_call.1} parent=39 // pred_check_branch
          %455 = sbr.rel (%p453) target = $region52
        $region51: #{tpu_custom_call.1} parent=39 // pred_region
          %s457 = ssub.s32 128, 128
          %458 = vsyncadd %s436, %s457
          %s459 = smul.addr %s24, 128
          %s460 = scalar_lea.hbm %s6, %s459
          %s462 = sshll.u32 %s439, 4
          %s463 = int_to_ptr.vmem [resolvable:$true] %s462
          %465 = dma.vmem_to_hbm [thread:$0]  %s463, 128, %s460, %s436
        $region52: #{tpu_custom_call.1} parent=39 // pred_fallthru
          _
      $region40: #{tpu_custom_call.1} parent=5 // pred_fallthru
        _
      %p466 = scmp.le.s32.totalorder 2, %s19
      // Predicated region
      $region53: #{tpu_custom_call.1} parent=5 // pred_check
        %p467 = pneg %p466
      $region54: #{tpu_custom_call.1} parent=5 // pred_check_branch
        %469 = sbr.rel (%p467) target = $region56
      $region55: #{tpu_custom_call.1} parent=5 // pred_region
        %s470 = ssub.s32 %s19, 2
        // Predicated region
        $region57: #{tpu_custom_call.1} parent=55 // pred_check
          %p471 = pneg %p158
        $region58: #{tpu_custom_call.1} parent=55 // pred_check_branch
          %473 = sbr.rel (%p471) target = $region60
        $region59: #{tpu_custom_call.1} parent=55 // pred_region
          %s474 = sand.u32 %s143, 1
          %s475 = scalar_lea.sflag [#allocation5], %s474
          %s476 = sand.u32 %s143, 1
          %s477 = smul.addr %s476, 8
          %s478 = scalar_lea.vmem [#allocation4], %s477
          %479 = dma.done %s475, 128
        $region60: #{tpu_custom_call.1} parent=55 // pred_fallthru
          _
        // Predicated region
        $region61: #{tpu_custom_call.1} parent=55 // pred_check
          %p480 = pneg %p184
        $region62: #{tpu_custom_call.1} parent=55 // pred_check_branch
          %482 = sbr.rel (%p480) target = $region64
        $region63: #{tpu_custom_call.1} parent=55 // pred_region
          %s483 = sand.u32 %s169, 1
          %s484 = scalar_lea.sflag [#allocation7], %s483
          %s485 = sand.u32 %s169, 1
          %s486 = smul.addr %s485, 8
          %s487 = scalar_lea.vmem [#allocation6], %s486
          %488 = dma.done %s484, 128
        $region64: #{tpu_custom_call.1} parent=55 // pred_fallthru
          _
      $region56: #{tpu_custom_call.1} parent=5 // pred_fallthru
        _
    $region6: #{tpu_custom_call.1} parent=1 // loop_footer
      %s23 = sadd.s32 1, %s19
    $region7: #{tpu_custom_call.1} parent=1 // loop_footer_branch
      %18 = sbr.rel target = $region3
    $region8: #{tpu_custom_call.1} parent=1 // loop_exit
      _
    %489 = vsyncpa [#allocation5], 1
    %s490 = scalar_lea.sflag [#allocation5], 1
    %491 = vsyncpa %s490, 1
    %492 = vsyncpa [#allocation7], 1
    %s493 = scalar_lea.sflag [#allocation7], 1
    %494 = vsyncpa %s493, 1

</llo_original>
